<compile_context>
chip_gen: v7x
topology: tpu7x:2x2x1
jax: 0.10.0
libtpu: 0.0.40
codegen_flags: <defaults>
</compile_context>

<pallas_src>
import jax
import jax.numpy as jnp
from jax import lax
from jax.experimental import pallas as pl
from jax.experimental.pallas import tpu as pltpu

_EPS2 = 1e-24  # (F.normalize eps = 1e-12)^2, used as an rsqrt clamp (equivalent math)


def _round_up(x, m):
    return ((x + m - 1) // m) * m


def _cdiv(a, b):
    return -(-a // b)


def _l2_normalize(v):
    # v / max(||v||, 1e-12)  ==  v * rsqrt(max(||v||^2, 1e-24))   (EUP rsqrt, no divide)
    return v * lax.rsqrt(
        jnp.maximum(jnp.sum(v * v, axis=-1, keepdims=True), jnp.float32(_EPS2)))


# --------------------------------------------------------------------------------------
# Kernels
# --------------------------------------------------------------------------------------
def _vit_kernel_resident(x_ref, wenc_ref, heads_ref, out_ref):
    """grid=(nb,): whole encoder weight resident in VMEM, no reduction axis.

    x_ref     : [tm, F_pad]    f32   flattened image tile (cast to bf16 in VMEM here)
    wenc_ref  : [F_pad, D_pad] bf16  encoder projection (constant block index -> one DMA)
    heads_ref : [D_pad, HP]    bf16  normalized fused (yes ++ no) heads, scale folded in
    out_ref   : [tm, HP]       f32   fused logits tile (lane-dense unmasked store)
    """
    feats = jnp.dot(x_ref[...].astype(jnp.bfloat16), wenc_ref[...],
                    preferred_element_type=jnp.float32)
    feats_n = _l2_normalize(feats)
    out_ref[...] = jnp.dot(feats_n.astype(jnp.bfloat16), heads_ref[...],
                           preferred_element_type=jnp.float32)


def _vit_kernel_tiled(x_ref, wenc_ref, heads_ref, out_ref, acc_ref):
    """grid=(nb, nk): F-reduction tiled (last axis), f32 VMEM accumulator.

    x_ref     : [tm, tf]      f32   flattened image tile
    wenc_ref  : [tf, D_pad]   bf16  encoder projection tile (reduction over tf)
    heads_ref : [D_pad, HP]   bf16  normalized fused heads (resident)
    out_ref   : [tm, HP]      f32
    acc_ref   : [tm, D_pad]   f32   accumulator, persists across the k axis
    """
    k = pl.program_id(1)

    @pl.when(k == 0)
    def _init():
        acc_ref[...] = jnp.zeros_like(acc_ref)

    acc_ref[...] += jnp.dot(x_ref[...].astype(jnp.bfloat16), wenc_ref[...],
                            preferred_element_type=jnp.float32)

    @pl.when(k == pl.num_programs(1) - 1)
    def _finalize():
        feats_n = _l2_normalize(acc_ref[...])
        out_ref[...] = jnp.dot(feats_n.astype(jnp.bfloat16), heads_ref[...],
                               preferred_element_type=jnp.float32)


# --------------------------------------------------------------------------------------
# Wrapper
# --------------------------------------------------------------------------------------
def vit_classifier_forward(x_nchw, w_enc, fc_yes, fc_no, scale, *,
                           tm_target=256, tf_target=2048,
                           vmem_budget_bytes=12 * 2**20):
    B = x_nchw.shape[0]
    x_flat = x_nchw.reshape(B, -1)          # reshape only; stays f32 (no cast pass)
    F_dim = x_flat.shape[1]
    F_in, D = w_enc.shape
    assert F_in == F_dim
    K = fc_yes.shape[0]
    assert fc_yes.shape == (K, D) and fc_no.shape == (K, D)

    D_pad = _round_up(D, 128)
    HP = _round_up(2 * K, 128)              # fused yes/no head rows -> lane-dense output
    F_pad = _round_up(F_dim, 128)

    # --- batch tile: multiple of 16 (bf16 sublane packing), target 256 (MXU M fill);
    # for large batches keep nb >= 2 so the "parallel" axis feeds both v7x TensorCores.
    tm = min(tm_target, _round_up(B, 16))
    if B > 2 * 128:
        tm = min(tm, _round_up(_cdiv(B, 2), 16))
    nb = _cdiv(B, tm)
    B_pad = nb * tm

    # --- VMEM footprint model (double-buffered pipeline blocks + accumulator) ----------
    def _vmem_bytes(tm_, tf_, nk_):
        x_blk = tm_ * tf_ * 4 * 2           # f32 input, double buffered
        w_blk = tf_ * D_pad * 2 * 2         # bf16
        h_blk = D_pad * HP * 2 * 2          # bf16
        o_blk = tm_ * HP * 4 * 2            # f32
        acc = tm_ * D_pad * 4 if nk_ > 1 else 0
        return x_blk + w_blk + h_blk + o_blk + acc

    resident = _vmem_bytes(tm, F_pad, 1) <= vmem_budget_bytes
    if resident:
        tf, nk = F_pad, 1
    else:
        nk = max(2, _cdiv(F_pad, tf_target))
        tf = _round_up(_cdiv(F_pad, nk), 128)
        while _vmem_bytes(tm, tf, nk) > vmem_budget_bytes and tf > 128:
            nk += 1
            tf = _round_up(_cdiv(F_pad, nk), 128)
        F_pad = nk * tf

    # --- one-time weight prep (checkpoint-style; not per-forward activation traffic) ---
    if w_enc.shape == (F_pad, D_pad):
        w_p = w_enc.astype(jnp.bfloat16)
    else:
        w_p = jnp.zeros((F_pad, D_pad), jnp.bfloat16).at[:F_dim, :D].set(
            w_enc.astype(jnp.bfloat16))
    heads = jnp.concatenate([fc_yes, fc_no], axis=0).astype(jnp.float32)   # [2K, D]
    heads_n = _l2_normalize(heads) * jnp.float32(scale)                    # fold scale in
    h_t = jnp.zeros((D_pad, HP), jnp.bfloat16).at[:D, :2 * K].set(
        heads_n.T.astype(jnp.bfloat16))                                    # pre-transposed

    # --- activations: raw f32, padded along F only when ragged --------------------------
    x_in = x_flat
    if F_pad != F_dim:
        # TODO(synk): replace with in-kernel masking of the last reduction tile so the
        # ragged-F case also avoids this extra HBM pass over x.
        x_in = jnp.zeros((B, F_pad), x_flat.dtype).at[:, :F_dim].set(x_flat)
    # The batch axis is NOT padded: the last (partial) batch block reads undefined rows,
    # which only affect padded output rows that are sliced off below.

    flops = 2 * B_pad * F_pad * D_pad + 2 * B_pad * D_pad * HP
    w_reads = 1 if resident else nb
    bytes_accessed = (B * F_pad * 4 + w_reads * F_pad * D_pad * 2
                      + D_pad * HP * 2 + B_pad * HP * 4)
    cost = pl.CostEstimate(flops=flops, transcendentals=B_pad,
                           bytes_accessed=bytes_accessed)

    if resident:
        grid_spec = pltpu.PrefetchScalarGridSpec(
            num_scalar_prefetch=0,
            grid=(nb,),
            in_specs=[
                pl.BlockSpec((tm, F_pad), lambda i: (i, 0)),      # x batch tile
                pl.BlockSpec((F_pad, D_pad), lambda i: (0, 0)),   # w_enc (resident)
                pl.BlockSpec((D_pad, HP), lambda i: (0, 0)),      # fused heads (resident)
            ],
            out_specs=pl.BlockSpec((tm, HP), lambda i: (i, 0)),
        )
        kernel = _vit_kernel_resident
        dim_sem = ("parallel",)
    else:
        grid_spec = pltpu.PrefetchScalarGridSpec(
            num_scalar_prefetch=0,
            grid=(nb, nk),                                        # F reduction last
            in_specs=[
                pl.BlockSpec((tm, tf), lambda i, k: (i, k)),      # x tile
                pl.BlockSpec((tf, D_pad), lambda i, k: (k, 0)),   # w_enc tile
                pl.BlockSpec((D_pad, HP), lambda i, k: (0, 0)),   # fused heads (resident)
            ],
            out_specs=pl.BlockSpec((tm, HP), lambda i, k: (i, 0)),
            scratch_shapes=[pltpu.VMEM((tm, D_pad), jnp.float32)],
        )
        kernel = _vit_kernel_tiled
        dim_sem = ("parallel", "arbitrary")

    logits = pl.pallas_call(
        kernel,
        out_shape=jax.ShapeDtypeStruct((B_pad, HP), jnp.float32),
        grid_spec=grid_spec,
        compiler_params=pltpu.CompilerParams(dimension_semantics=dim_sem),
        cost_estimate=cost,
    )(x_in, w_p, h_t)

    return logits[:B, :K], logits[:B, K:2 * K]


# --------------------------------------------------------------------------------------
# References
# --------------------------------------------------------------------------------------
def _reference_forward(x_nchw, w_enc, fc_yes, fc_no, scale):
    """Pure-f32 reference mirroring the PyTorch forward."""
    B = x_nchw.shape[0]
    x_flat = x_nchw.reshape(B, -1)
    feats = x_flat @ w_enc
    eps = 1e-12

    def l2n(v):
        return v / jnp.maximum(jnp.linalg.norm(v, axis=-1, keepdims=True), eps)

    feats_n = l2n(feats)
    return scale * feats_n @ l2n(fc_yes).T, scale * feats_n @ l2n(fc_no).T


def _reference_forward_bf16(x_nchw, w_enc, fc_yes, fc_no, scale):
    """Reference with the same bf16 MXU-input rounding as the kernel (f32 accumulate)."""
    B = x_nchw.shape[0]
    K = fc_yes.shape[0]
    x_flat = x_nchw.reshape(B, -1)
    feats = jnp.dot(x_flat.astype(jnp.bfloat16), w_enc.astype(jnp.bfloat16),
                    preferred_element_type=jnp.float32)
    feats_n = _l2_normalize(feats)
    heads = jnp.concatenate([fc_yes, fc_no], axis=0).astype(jnp.float32)
    heads_n = (_l2_normalize(heads) * jnp.float32(scale)).astype(jnp.bfloat16)
    logits = jnp.dot(feats_n.astype(jnp.bfloat16), heads_n.T,
                     preferred_element_type=jnp.float32)
    return logits[:, :K], logits[:, K:]


# --------------------------------------------------------------------------------------
# Self-test
# --------------------------------------------------------------------------------------
if __name__ == "__main__":
    key = jax.random.PRNGKey(0)

    def _run_case(idx, B, C, H, W, D, K, scale, **fwd_kwargs):
        k_x, k_w, k_y, k_n = jax.random.split(jax.random.fold_in(key, idx), 4)
        x = jax.random.normal(k_x, (B, C, H, W), dtype=jnp.float32)
        # TODO(synk): the real image_encoder is an injected pretrained ViT backbone; it is
        # modeled here as a single deterministic linear projection of the flattened image.
        w_enc = jax.random.normal(k_w, (C * H * W, D), dtype=jnp.float32) * 0.02
        fc_yes = jax.random.normal(k_y, (K, D), dtype=jnp.float32) * 0.02
        fc_no = jax.random.normal(k_n, (K, D), dtype=jnp.float32) * 0.02

        ly, ln = vit_classifier_forward(x, w_enc, fc_yes, fc_no, scale, **fwd_kwargs)
        jax.block_until_ready((ly, ln))
        assert ly.shape == (B, K) and ln.shape == (B, K)

        # Tight check vs. a reference with the same bf16 MXU-input rounding.
        ly_q, ln_q = _reference_forward_bf16(x, w_enc, fc_yes, fc_no, scale)
        assert jnp.allclose(ly, ly_q, atol=2e-2, rtol=1e-3)
        assert jnp.allclose(ln, ln_q, atol=2e-2, rtol=1e-3)

        # Looser check vs. pure-f32 PyTorch math (bf16 quantization noise only;
        # scale=100 amplifies ~1e-3 cosine error to ~0.1-0.5 logit units).
        ly_f, ln_f = _reference_forward(x, w_enc, fc_yes, fc_no, scale)
        assert jnp.allclose(ly, ly_f, atol=1.0, rtol=5e-2)
        assert jnp.allclose(ln, ln_f, atol=1.0, rtol=5e-2)

    # Case 1: small, lane-aligned F -> resident (single-axis) path, no wrapper copy of x.
    _run_case(0, B=2, C=4, H=16, W=16, D=128, K=10, scale=100.0)

    # Case 2: ragged B / F / D plus a tiny VMEM budget to force the tiled-reduction path
    # (exercises padding fallbacks, partial batch block, and the accumulator kernel).
    _run_case(1, B=20, C=3, H=20, W=20, D=192, K=10, scale=100.0,
              vmem_budget_bytes=1 << 20)

    print("KERNEL_OK")
</pallas_src>

<mosaic_0001>
module attributes {stable_mosaic.version = 11 : i64} {
  func.func @_vit_kernel_resident(%arg0: i32, %arg1: memref<16x1024xf32, #tpu.memory_space<vmem>>, %arg2: memref<1024x128xbf16, #tpu.memory_space<vmem>>, %arg3: memref<128x128xbf16, #tpu.memory_space<vmem>>, %arg4: memref<16x128xf32, #tpu.memory_space<vmem>>) attributes {dimension_semantics = [#tpu.dimension_semantics<parallel>], iteration_bounds = array<i64: 1>, scalar_prefetch = 0 : i64, scratch_operands = 0 : i64, tpu.core_type = #tpu.core_type<tc>, window_params = [{transform_indices = @transform_0, window_bounds = array<i64: 16, 1024>}, {pipeline_mode = #tpu.pipeline_mode<synchronous>, transform_indices = @transform_1, window_bounds = array<i64: 1024, 128>}, {pipeline_mode = #tpu.pipeline_mode<synchronous>, transform_indices = @transform_2, window_bounds = array<i64: 128, 128>}, {transform_indices = @transform_3, window_bounds = array<i64: 16, 128>}]} {
    %c0 = arith.constant 0 : index
    %c0_0 = arith.constant 0 : index
    %0 = vector.load %arg1[%c0, %c0_0] : memref<16x1024xf32, #tpu.memory_space<vmem>>, vector<16x1024xf32>
    %1 = arith.truncf %0 : vector<16x1024xf32> to vector<16x1024xbf16>
    %c0_1 = arith.constant 0 : index
    %c0_2 = arith.constant 0 : index
    %2 = vector.load %arg2[%c0_1, %c0_2] : memref<1024x128xbf16, #tpu.memory_space<vmem>>, vector<1024x128xbf16>
    %cst = arith.constant dense<0.000000e+00> : vector<16x128xf32>
    %3 = tpu.matmul %1, %2, %cst {dimension_numbers = #tpu.dot_dimension_numbers<[1], [0], [0], [1], [0, 0, 1, 1], [], []>} : vector<16x1024xbf16>, vector<1024x128xbf16>, vector<16x128xf32> -> vector<16x128xf32>
    %4 = arith.mulf %3, %3 : vector<16x128xf32>
    %cst_3 = arith.constant dense<0.000000e+00> : vector<16xf32>
    %5 = vector.multi_reduction <add>, %4, %cst_3 [1] : vector<16x128xf32> to vector<16xf32>
    %6 = vector.shape_cast %5 : vector<16xf32> to vector<16x1xf32>
    %cst_4 = arith.constant 1.000000e-24 : f32
    %7 = vector.broadcast %cst_4 : f32 to vector<16x1xf32>
    %8 = arith.maximumf %6, %7 : vector<16x1xf32>
    %9 = math.rsqrt %8 : vector<16x1xf32>
    %10 = vector.broadcast %9 : vector<16x1xf32> to vector<16x128xf32>
    %11 = arith.mulf %3, %10 : vector<16x128xf32>
    %12 = arith.truncf %11 : vector<16x128xf32> to vector<16x128xbf16>
    %c0_5 = arith.constant 0 : index
    %c0_6 = arith.constant 0 : index
    %13 = vector.load %arg3[%c0_5, %c0_6] : memref<128x128xbf16, #tpu.memory_space<vmem>>, vector<128x128xbf16>
    %cst_7 = arith.constant dense<0.000000e+00> : vector<16x128xf32>
    %14 = tpu.matmul %12, %13, %cst_7 {dimension_numbers = #tpu.dot_dimension_numbers<[1], [0], [0], [1], [0, 0, 1, 1], [], []>} : vector<16x128xbf16>, vector<128x128xbf16>, vector<16x128xf32> -> vector<16x128xf32>
    %c0_8 = arith.constant 0 : index
    %c0_9 = arith.constant 0 : index
    %15 = vector.load %arg4[%c0_8, %c0_9] : memref<16x128xf32, #tpu.memory_space<vmem>>, vector<16x128xf32>
    tpu.vector_store %arg4[%c0_8, %c0_9], %14 {strides = array<i32>} : memref<16x128xf32, #tpu.memory_space<vmem>>, vector<16x128xf32>,
    return
  }
  func.func @transform_0(%arg0: i32) -> (i32, i32) {
    %c0_i32 = arith.constant 0 : i32
    %c0_i32_0 = arith.constant 0 : i32
    return %arg0, %c0_i32 : i32, i32
  }
  func.func @transform_1(%arg0: i32) -> (i32, i32) {
    %c0_i32 = arith.constant 0 : i32
    %c0_i32_0 = arith.constant 0 : i32
    %c0_i32_1 = arith.constant 0 : i32
    return %c0_i32, %c0_i32_0 : i32, i32
  }
  func.func @transform_2(%arg0: i32) -> (i32, i32) {
    %c0_i32 = arith.constant 0 : i32
    %c0_i32_0 = arith.constant 0 : i32
    %c0_i32_1 = arith.constant 0 : i32
    return %c0_i32, %c0_i32_0 : i32, i32
  }
  func.func @transform_3(%arg0: i32) -> (i32, i32) {
    %c0_i32 = arith.constant 0 : i32
    %c0_i32_0 = arith.constant 0 : i32
    return %arg0, %c0_i32 : i32, i32
  }
}

</mosaic_0001>

<llo_original>
// kernel: tpu_custom_call.1
$region0: #{tpu_custom_call.1}
  #allocation0 [shape = 'u32[]', space=smem, size = 0x4, offset = 0x4, fixed_abs, tag = 'smem constant byte address 0x4 - core index']
  #allocation1 [shape = 'u32[144,128]{1,0:T(1,128)}', space=vmem, size = 0x12000, scoped, tag = 'internal scratch']
  %s0 = inlined_call_operand.hbm [shape: f32[2,1024], index: 0, kind: input, shape index: {}]
  %s1 = inlined_call_operand.hbm [shape: bf16[1024,128], index: 1, kind: input, shape index: {}]
  %s2 = inlined_call_operand.hbm [shape: bf16[128,128], index: 2, kind: input, shape index: {}]
  %s3 = inlined_call_operand.hbm [shape: f32[16,128], index: 3, kind: output, shape index: {}]
  %s4 = sld [smem:[#allocation0]]
  $region34: #{tpu_custom_call.1} parent=0
    _
  %s6 = ssub.s32 1, %s4
  %s7 = scalar_select 0, %s6, %s4
  $region1: #{tpu_custom_call.1} parent=0
    #allocation2 [shape = 'u8[65536]{0}', space=vmem, size = 0x10000, scoped, tag = 'input window, operand 0, single buffered']
    #allocation3 [shape = 's32[1]{0}', space=sflag, size = 0x4, scoped, tag = 'scoped memory for tpu_custom_call.1']
    #allocation4 [shape = 's32[1]{0}', space=sflag, size = 0x4, scoped, tag = 'scoped memory for tpu_custom_call.1']
    #allocation5 [shape = 'u8[262144]{0}', space=vmem, size = 0x40000, scoped, tag = 'input window, operand 1, single buffered']
    #allocation6 [shape = 's32[1]{0}', space=sflag, size = 0x4, scoped, tag = 'scoped memory for tpu_custom_call.1']
    #allocation7 [shape = 'u8[32768]{0}', space=vmem, size = 0x8000, scoped, tag = 'input window, operand 2, single buffered']
    #allocation8 [shape = 'u8[8192]{0}', space=vmem, size = 0x2000, scoped, tag = 'output window, operand 0, single buffered']
    %8 = vsyncpa [#allocation3], 0
    %9 = vsyncpa [#allocation6], 0
    %10 = vsyncpa [#allocation4], 0
    // Predicated region
    $region2: #{tpu_custom_call.1} parent=1 // pred_check
      _
    $region3: #{tpu_custom_call.1} parent=1 // pred_check_branch
      %12 = sbr.rel (0) target = $region5
    $region4: #{tpu_custom_call.1} parent=1 // pred_region
      %s14 = ssub.s32 2048, 256
      %15 = vsyncadd [#allocation3], %s14
      %s16 = sshll.u32 [#allocation2], 4
      %s17 = int_to_ptr.vmem [resolvable:$true] %s16
      %22 = dma.hbm_to_vmem [thread:$0]  %s0, 256, %s17, [#allocation3], 256, 256, 16
    $region5: #{tpu_custom_call.1} parent=1 // pred_fallthru
      _
    // Predicated region
    $region6: #{tpu_custom_call.1} parent=1 // pred_check
      _
    $region7: #{tpu_custom_call.1} parent=1 // pred_check_branch
      %24 = sbr.rel (0) target = $region9
    $region8: #{tpu_custom_call.1} parent=1 // pred_region
      %s26 = ssub.s32 8192, 8192
      %27 = vsyncadd [#allocation6], %s26
      %s28 = sshll.u32 [#allocation5], 4
      %s29 = int_to_ptr.vmem [resolvable:$true] %s28
      %34 = dma.hbm_to_vmem [thread:$0]  %s1, 8192, %s29, [#allocation6], 64, 64, 4
    $region9: #{tpu_custom_call.1} parent=1 // pred_fallthru
      _
    // Predicated region
    $region10: #{tpu_custom_call.1} parent=1 // pred_check
      _
    $region11: #{tpu_custom_call.1} parent=1 // pred_check_branch
      %36 = sbr.rel (0) target = $region13
    $region12: #{tpu_custom_call.1} parent=1 // pred_region
      %s38 = ssub.s32 1024, 1024
      %39 = vsyncadd [#allocation6], %s38
      %s40 = sshll.u32 [#allocation7], 4
      %s41 = int_to_ptr.vmem [resolvable:$true] %s40
      %46 = dma.hbm_to_vmem [thread:$0]  %s2, 1024, %s41, [#allocation6], 64, 64, 4
    $region13: #{tpu_custom_call.1} parent=1 // pred_fallthru
      _
    // Predicated region
    $region14: #{tpu_custom_call.1} parent=1 // pred_check
      _
    $region15: #{tpu_custom_call.1} parent=1 // pred_check_branch
      %48 = sbr.rel (0) target = $region17
    $region16: #{tpu_custom_call.1} parent=1 // pred_region
      %49 = dma.done [#allocation3], 2048
    $region17: #{tpu_custom_call.1} parent=1 // pred_fallthru
      _
    // Predicated region
    $region18: #{tpu_custom_call.1} parent=1 // pred_check
      _
    $region19: #{tpu_custom_call.1} parent=1 // pred_check_branch
      %51 = sbr.rel (0) target = $region21
    $region20: #{tpu_custom_call.1} parent=1 // pred_region
      %52 = dma.done [#allocation6], 8192
    $region21: #{tpu_custom_call.1} parent=1 // pred_fallthru
      _
    // Predicated region
    $region22: #{tpu_custom_call.1} parent=1 // pred_check
      _
    $region23: #{tpu_custom_call.1} parent=1 // pred_check_branch
      %54 = sbr.rel (0) target = $region25
    $region24: #{tpu_custom_call.1} parent=1 // pred_region
      %55 = dma.done [#allocation6], 1024
    $region25: #{tpu_custom_call.1} parent=1 // pred_fallthru
      _
    %v57 = vld [vmem:[#allocation2] sm:$0xff]
    %v58 = vld [vmem:[#allocation2 + $0x8] sm:$0xff]
    %v59 = vld [vmem:[#allocation2 + $0x10] sm:$0xff]
    %v60 = vld [vmem:[#allocation2 + $0x18] sm:$0xff]
    %v61 = vld [vmem:[#allocation2 + $0x20] sm:$0xff]
    %v62 = vld [vmem:[#allocation2 + $0x28] sm:$0xff]
    %v63 = vld [vmem:[#allocation2 + $0x30] sm:$0xff]
    %v64 = vld [vmem:[#allocation2 + $0x38] sm:$0xff]
    %v65 = vld [vmem:[#allocation2 + $0x40] sm:$0xff]
    %v66 = vld [vmem:[#allocation2 + $0x48] sm:$0xff]
    %v67 = vld [vmem:[#allocation2 + $0x50] sm:$0xff]
    %v68 = vld [vmem:[#allocation2 + $0x58] sm:$0xff]
    %v69 = vld [vmem:[#allocation2 + $0x60] sm:$0xff]
    %v70 = vld [vmem:[#allocation2 + $0x68] sm:$0xff]
    %v71 = vld [vmem:[#allocation2 + $0x70] sm:$0xff]
    %v72 = vld [vmem:[#allocation2 + $0x78] sm:$0xff]
    %v89 = vcombine.low %v57, %v59
    %v90 = vcombine.high %v57, %v59
    %v91 = vcombine.low %v61, %v63
    %v92 = vcombine.high %v61, %v63
    %v94 = vunpack.c.l.s4 1983009808
    %v95 = vunpack.c.0.s8 %v94
    %v96 = vlaneseq
    %v97 = vshrl.u32 %v96, 7
    %v98 = vsub.s32 %v95, %v97
    %v99 = vrot.slane %v89, %v98
    %v101 = vunpack.c.l.s4 1983009808
    %v102 = vunpack.c.0.s8 %v101
    %v103 = vlaneseq
    %v104 = vshrl.u32 %v103, 7
    %v105 = vsub.s32 %v102, %v104
    %v106 = vrot.slane %v90, %v105
    %v108 = vunpack.c.l.s4 1983009808
    %v109 = vunpack.c.0.s8 %v108
    %v110 = vlaneseq
    %v111 = vshrl.u32 %v110, 7
    %v112 = vsub.s32 %v109, %v111
    %v113 = vrot.slane %v91, %v112
    %v115 = vunpack.c.l.s4 1983009808
    %v116 = vunpack.c.0.s8 %v115
    %v117 = vlaneseq
    %v118 = vshrl.u32 %v117, 7
    %v119 = vsub.s32 %v116, %v118
    %v120 = vrot.slane %v92, %v119
    %v121 = vcombine.low %v99, %v113
    %v122 = vcombine.high %v99, %v113
    %v123 = vcombine.low %v106, %v120
    %v124 = vcombine.high %v106, %v120
    %v125 = vcombine.low %v58, %v60
    %v126 = vcombine.high %v58, %v60
    %v127 = vcombine.low %v62, %v64
    %v128 = vcombine.high %v62, %v64
    %v130 = vunpack.c.l.s4 1983009808
    %v131 = vunpack.c.0.s8 %v130
    %v132 = vlaneseq
    %v133 = vshrl.u32 %v132, 7
    %v134 = vsub.s32 %v131, %v133
    %v135 = vrot.slane %v125, %v134
    %v137 = vunpack.c.l.s4 1983009808
    %v138 = vunpack.c.0.s8 %v137
    %v139 = vlaneseq
    %v140 = vshrl.u32 %v139, 7
    %v141 = vsub.s32 %v138, %v140
    %v142 = vrot.slane %v126, %v141
    %v144 = vunpack.c.l.s4 1983009808
    %v145 = vunpack.c.0.s8 %v144
    %v146 = vlaneseq
    %v147 = vshrl.u32 %v146, 7
    %v148 = vsub.s32 %v145, %v147
    %v149 = vrot.slane %v127, %v148
    %v151 = vunpack.c.l.s4 1983009808
    %v152 = vunpack.c.0.s8 %v151
    %v153 = vlaneseq
    %v154 = vshrl.u32 %v153, 7
    %v155 = vsub.s32 %v152, %v154
    %v156 = vrot.slane %v128, %v155
    %v157 = vcombine.low %v135, %v149
    %v158 = vcombine.high %v135, %v149
    %v159 = vcombine.low %v142, %v156
    %v160 = vcombine.high %v142, %v156
    %v161 = vcombine.low %v65, %v67
    %v162 = vcombine.high %v65, %v67
    %v163 = vcombine.low %v69, %v71
    %v164 = vcombine.high %v69, %v71
    %v166 = vunpack.c.l.s4 1983009808
    %v167 = vunpack.c.0.s8 %v166
    %v168 = vlaneseq
    %v169 = vshrl.u32 %v168, 7
    %v170 = vsub.s32 %v167, %v169
    %v171 = vrot.slane %v161, %v170
    %v173 = vunpack.c.l.s4 1983009808
    %v174 = vunpack.c.0.s8 %v173
    %v175 = vlaneseq
    %v176 = vshrl.u32 %v175, 7
    %v177 = vsub.s32 %v174, %v176
    %v178 = vrot.slane %v162, %v177
    %v180 = vunpack.c.l.s4 1983009808
    %v181 = vunpack.c.0.s8 %v180
    %v182 = vlaneseq
    %v183 = vshrl.u32 %v182, 7
    %v184 = vsub.s32 %v181, %v183
    %v185 = vrot.slane %v163, %v184
    %v187 = vunpack.c.l.s4 1983009808
    %v188 = vunpack.c.0.s8 %v187
    %v189 = vlaneseq
    %v190 = vshrl.u32 %v189, 7
    %v191 = vsub.s32 %v188, %v190
    %v192 = vrot.slane %v164, %v191
    %v193 = vcombine.low %v171, %v185
    %v194 = vcombine.high %v171, %v185
    %v195 = vcombine.low %v178, %v192
    %v196 = vcombine.high %v178, %v192
    %v197 = vcombine.low %v66, %v68
    %v198 = vcombine.high %v66, %v68
    %v199 = vcombine.low %v70, %v72
    %v200 = vcombine.high %v70, %v72
    %v202 = vunpack.c.l.s4 1983009808
    %v203 = vunpack.c.0.s8 %v202
    %v204 = vlaneseq
    %v205 = vshrl.u32 %v204, 7
    %v206 = vsub.s32 %v203, %v205
    %v207 = vrot.slane %v197, %v206
    %v209 = vunpack.c.l.s4 1983009808
    %v210 = vunpack.c.0.s8 %v209
    %v211 = vlaneseq
    %v212 = vshrl.u32 %v211, 7
    %v213 = vsub.s32 %v210, %v212
    %v214 = vrot.slane %v198, %v213
    %v216 = vunpack.c.l.s4 1983009808
    %v217 = vunpack.c.0.s8 %v216
    %v218 = vlaneseq
    %v219 = vshrl.u32 %v218, 7
    %v220 = vsub.s32 %v217, %v219
    %v221 = vrot.slane %v199, %v220
    %v223 = vunpack.c.l.s4 1983009808
    %v224 = vunpack.c.0.s8 %v223
    %v225 = vlaneseq
    %v226 = vshrl.u32 %v225, 7
    %v227 = vsub.s32 %v224, %v226
    %v228 = vrot.slane %v200, %v227
    %v229 = vcombine.low %v207, %v221
    %v230 = vcombine.high %v207, %v221
    %v231 = vcombine.low %v214, %v228
    %v232 = vcombine.high %v214, %v228
    %v249 = vpack.c.bf16 %v193, %v121
    %v250 = vpack.c.bf16 %v194, %v122
    %v251 = vpack.c.bf16 %v195, %v123
    %v252 = vpack.c.bf16 %v196, %v124
    %v253 = vpack.c.bf16 %v229, %v157
    %v254 = vpack.c.bf16 %v230, %v158
    %v255 = vpack.c.bf16 %v231, %v159
    %v256 = vpack.c.bf16 %v232, %v160
    %v257 = vld [vmem:[#allocation5] sm:$0xf]
    %v258 = vld [vmem:[#allocation5 + $0x4] sm:$0xf]
    %v259 = vld [vmem:[#allocation5 + $0x8] sm:$0xf]
    %v260 = vld [vmem:[#allocation5 + $0xc] sm:$0xf]
    %v261 = vld [vmem:[#allocation5 + $0x10] sm:$0xf]
    %v262 = vld [vmem:[#allocation5 + $0x14] sm:$0xf]
    %v263 = vld [vmem:[#allocation5 + $0x18] sm:$0xf]
    %v264 = vld [vmem:[#allocation5 + $0x1c] sm:$0xf]
    %v265 = vld [vmem:[#allocation5 + $0x20] sm:$0xf]
    %v266 = vld [vmem:[#allocation5 + $0x24] sm:$0xf]
    %v267 = vld [vmem:[#allocation5 + $0x28] sm:$0xf]
    %v268 = vld [vmem:[#allocation5 + $0x2c] sm:$0xf]
    %v269 = vld [vmem:[#allocation5 + $0x30] sm:$0xf]
    %v270 = vld [vmem:[#allocation5 + $0x34] sm:$0xf]
    %v271 = vld [vmem:[#allocation5 + $0x38] sm:$0xf]
    %v272 = vld [vmem:[#allocation5 + $0x3c] sm:$0xf]
    %v273 = vld [vmem:[#allocation5 + $0x40] sm:$0xf]
    %v274 = vld [vmem:[#allocation5 + $0x44] sm:$0xf]
    %v275 = vld [vmem:[#allocation5 + $0x48] sm:$0xf]
    %v276 = vld [vmem:[#allocation5 + $0x4c] sm:$0xf]
    %v277 = vld [vmem:[#allocation5 + $0x50] sm:$0xf]
    %v278 = vld [vmem:[#allocation5 + $0x54] sm:$0xf]
    %v279 = vld [vmem:[#allocation5 + $0x58] sm:$0xf]
    %v280 = vld [vmem:[#allocation5 + $0x5c] sm:$0xf]
    %v281 = vld [vmem:[#allocation5 + $0x60] sm:$0xf]
    %v282 = vld [vmem:[#allocation5 + $0x64] sm:$0xf]
    %v283 = vld [vmem:[#allocation5 + $0x68] sm:$0xf]
    %v284 = vld [vmem:[#allocation5 + $0x6c] sm:$0xf]
    %v285 = vld [vmem:[#allocation5 + $0x70] sm:$0xf]
    %v286 = vld [vmem:[#allocation5 + $0x74] sm:$0xf]
    %v287 = vld [vmem:[#allocation5 + $0x78] sm:$0xf]
    %v288 = vld [vmem:[#allocation5 + $0x7c] sm:$0xf]
    %v289 = vld [vmem:[#allocation5 + $0x80] sm:$0xf]
    %v290 = vld [vmem:[#allocation5 + $0x84] sm:$0xf]
    %v291 = vld [vmem:[#allocation5 + $0x88] sm:$0xf]
    %v292 = vld [vmem:[#allocation5 + $0x8c] sm:$0xf]
    %v293 = vld [vmem:[#allocation5 + $0x90] sm:$0xf]
    %v294 = vld [vmem:[#allocation5 + $0x94] sm:$0xf]
    %v295 = vld [vmem:[#allocation5 + $0x98] sm:$0xf]
    %v296 = vld [vmem:[#allocation5 + $0x9c] sm:$0xf]
    %v297 = vld [vmem:[#allocation5 + $0xa0] sm:$0xf]
    %v298 = vld [vmem:[#allocation5 + $0xa4] sm:$0xf]
    %v299 = vld [vmem:[#allocation5 + $0xa8] sm:$0xf]
    %v300 = vld [vmem:[#allocation5 + $0xac] sm:$0xf]
    %v301 = vld [vmem:[#allocation5 + $0xb0] sm:$0xf]
    %v302 = vld [vmem:[#allocation5 + $0xb4] sm:$0xf]
    %v303 = vld [vmem:[#allocation5 + $0xb8] sm:$0xf]
    %v304 = vld [vmem:[#allocation5 + $0xbc] sm:$0xf]
    %v305 = vld [vmem:[#allocation5 + $0xc0] sm:$0xf]
    %v306 = vld [vmem:[#allocation5 + $0xc4] sm:$0xf]
    %v307 = vld [vmem:[#allocation5 + $0xc8] sm:$0xf]
    %v308 = vld [vmem:[#allocation5 + $0xcc] sm:$0xf]
    %v309 = vld [vmem:[#allocation5 + $0xd0] sm:$0xf]
    %v310 = vld [vmem:[#allocation5 + $0xd4] sm:$0xf]
    %v311 = vld [vmem:[#allocation5 + $0xd8] sm:$0xf]
    %v312 = vld [vmem:[#allocation5 + $0xdc] sm:$0xf]
    %v313 = vld [vmem:[#allocation5 + $0xe0] sm:$0xf]
    %v314 = vld [vmem:[#allocation5 + $0xe4] sm:$0xf]
    %v315 = vld [vmem:[#allocation5 + $0xe8] sm:$0xf]
    %v316 = vld [vmem:[#allocation5 + $0xec] sm:$0xf]
    %v317 = vld [vmem:[#allocation5 + $0xf0] sm:$0xf]
    %v318 = vld [vmem:[#allocation5 + $0xf4] sm:$0xf]
    %v319 = vld [vmem:[#allocation5 + $0xf8] sm:$0xf]
    %v320 = vld [vmem:[#allocation5 + $0xfc] sm:$0xf]
    %v321 = vld [vmem:[#allocation5 + $0x100] sm:$0xf]
    %v322 = vld [vmem:[#allocation5 + $0x104] sm:$0xf]
    %v323 = vld [vmem:[#allocation5 + $0x108] sm:$0xf]
    %v324 = vld [vmem:[#allocation5 + $0x10c] sm:$0xf]
    %v325 = vld [vmem:[#allocation5 + $0x110] sm:$0xf]
    %v326 = vld [vmem:[#allocation5 + $0x114] sm:$0xf]
    %v327 = vld [vmem:[#allocation5 + $0x118] sm:$0xf]
    %v328 = vld [vmem:[#allocation5 + $0x11c] sm:$0xf]
    %v329 = vld [vmem:[#allocation5 + $0x120] sm:$0xf]
    %v330 = vld [vmem:[#allocation5 + $0x124] sm:$0xf]
    %v331 = vld [vmem:[#allocation5 + $0x128] sm:$0xf]
    %v332 = vld [vmem:[#allocation5 + $0x12c] sm:$0xf]
    %v333 = vld [vmem:[#allocation5 + $0x130] sm:$0xf]
    %v334 = vld [vmem:[#allocation5 + $0x134] sm:$0xf]
    %v335 = vld [vmem:[#allocation5 + $0x138] sm:$0xf]
    %v336 = vld [vmem:[#allocation5 + $0x13c] sm:$0xf]
    %v337 = vld [vmem:[#allocation5 + $0x140] sm:$0xf]
    %v338 = vld [vmem:[#allocation5 + $0x144] sm:$0xf]
    %v339 = vld [vmem:[#allocation5 + $0x148] sm:$0xf]
    %v340 = vld [vmem:[#allocation5 + $0x14c] sm:$0xf]
    %v341 = vld [vmem:[#allocation5 + $0x150] sm:$0xf]
    %v342 = vld [vmem:[#allocation5 + $0x154] sm:$0xf]
    %v343 = vld [vmem:[#allocation5 + $0x158] sm:$0xf]
    %v344 = vld [vmem:[#allocation5 + $0x15c] sm:$0xf]
    %v345 = vld [vmem:[#allocation5 + $0x160] sm:$0xf]
    %v346 = vld [vmem:[#allocation5 + $0x164] sm:$0xf]
    %v347 = vld [vmem:[#allocation5 + $0x168] sm:$0xf]
    %v348 = vld [vmem:[#allocation5 + $0x16c] sm:$0xf]
    %v349 = vld [vmem:[#allocation5 + $0x170] sm:$0xf]
    %v350 = vld [vmem:[#allocation5 + $0x174] sm:$0xf]
    %v351 = vld [vmem:[#allocation5 + $0x178] sm:$0xf]
    %v352 = vld [vmem:[#allocation5 + $0x17c] sm:$0xf]
    %v353 = vld [vmem:[#allocation5 + $0x180] sm:$0xf]
    %v354 = vld [vmem:[#allocation5 + $0x184] sm:$0xf]
    %v355 = vld [vmem:[#allocation5 + $0x188] sm:$0xf]
    %v356 = vld [vmem:[#allocation5 + $0x18c] sm:$0xf]
    %v357 = vld [vmem:[#allocation5 + $0x190] sm:$0xf]
    %v358 = vld [vmem:[#allocation5 + $0x194] sm:$0xf]
    %v359 = vld [vmem:[#allocation5 + $0x198] sm:$0xf]
    %v360 = vld [vmem:[#allocation5 + $0x19c] sm:$0xf]
    %v361 = vld [vmem:[#allocation5 + $0x1a0] sm:$0xf]
    %v362 = vld [vmem:[#allocation5 + $0x1a4] sm:$0xf]
    %v363 = vld [vmem:[#allocation5 + $0x1a8] sm:$0xf]
    %v364 = vld [vmem:[#allocation5 + $0x1ac] sm:$0xf]
    %v365 = vld [vmem:[#allocation5 + $0x1b0] sm:$0xf]
    %v366 = vld [vmem:[#allocation5 + $0x1b4] sm:$0xf]
    %v367 = vld [vmem:[#allocation5 + $0x1b8] sm:$0xf]
    %v368 = vld [vmem:[#allocation5 + $0x1bc] sm:$0xf]
    %v369 = vld [vmem:[#allocation5 + $0x1c0] sm:$0xf]
    %v370 = vld [vmem:[#allocation5 + $0x1c4] sm:$0xf]
    %v371 = vld [vmem:[#allocation5 + $0x1c8] sm:$0xf]
    %v372 = vld [vmem:[#allocation5 + $0x1cc] sm:$0xf]
    %v373 = vld [vmem:[#allocation5 + $0x1d0] sm:$0xf]
    %v374 = vld [vmem:[#allocation5 + $0x1d4] sm:$0xf]
    %v375 = vld [vmem:[#allocation5 + $0x1d8] sm:$0xf]
    %v376 = vld [vmem:[#allocation5 + $0x1dc] sm:$0xf]
    %v377 = vld [vmem:[#allocation5 + $0x1e0] sm:$0xf]
    %v378 = vld [vmem:[#allocation5 + $0x1e4] sm:$0xf]
    %v379 = vld [vmem:[#allocation5 + $0x1e8] sm:$0xf]
    %v380 = vld [vmem:[#allocation5 + $0x1ec] sm:$0xf]
    %v381 = vld [vmem:[#allocation5 + $0x1f0] sm:$0xf]
    %v382 = vld [vmem:[#allocation5 + $0x1f4] sm:$0xf]
    %v383 = vld [vmem:[#allocation5 + $0x1f8] sm:$0xf]
    %v384 = vld [vmem:[#allocation5 + $0x1fc] sm:$0xf]
    %v513 = vunpack.c.l.b16 %v257
    %v514 = vunpack.c.l.b16 %v258
    %v515 = vunpack.c.l.b16 %v259
    %v516 = vunpack.c.l.b16 %v260
    %v517 = vunpack.c.l.b16 %v261
    %v518 = vunpack.c.l.b16 %v262
    %v519 = vunpack.c.l.b16 %v263
    %v520 = vunpack.c.l.b16 %v264
    %v521 = vunpack.c.l.b16 %v265
    %v522 = vunpack.c.l.b16 %v266
    %v523 = vunpack.c.l.b16 %v267
    %v524 = vunpack.c.l.b16 %v268
    %v525 = vunpack.c.l.b16 %v269
    %v526 = vunpack.c.l.b16 %v270
    %v527 = vunpack.c.l.b16 %v271
    %v528 = vunpack.c.l.b16 %v272
    %v529 = vunpack.c.l.b16 %v273
    %v530 = vunpack.c.l.b16 %v274
    %v531 = vunpack.c.l.b16 %v275
    %v532 = vunpack.c.l.b16 %v276
    %v533 = vunpack.c.l.b16 %v277
    %v534 = vunpack.c.l.b16 %v278
    %v535 = vunpack.c.l.b16 %v279
    %v536 = vunpack.c.l.b16 %v280
    %v537 = vunpack.c.l.b16 %v281
    %v538 = vunpack.c.l.b16 %v282
    %v539 = vunpack.c.l.b16 %v283
    %v540 = vunpack.c.l.b16 %v284
    %v541 = vunpack.c.l.b16 %v285
    %v542 = vunpack.c.l.b16 %v286
    %v543 = vunpack.c.l.b16 %v287
    %v544 = vunpack.c.l.b16 %v288
    %v545 = vunpack.c.l.b16 %v289
    %v546 = vunpack.c.l.b16 %v290
    %v547 = vunpack.c.l.b16 %v291
    %v548 = vunpack.c.l.b16 %v292
    %v549 = vunpack.c.l.b16 %v293
    %v550 = vunpack.c.l.b16 %v294
    %v551 = vunpack.c.l.b16 %v295
    %v552 = vunpack.c.l.b16 %v296
    %v553 = vunpack.c.l.b16 %v297
    %v554 = vunpack.c.l.b16 %v298
    %v555 = vunpack.c.l.b16 %v299
    %v556 = vunpack.c.l.b16 %v300
    %v557 = vunpack.c.l.b16 %v301
    %v558 = vunpack.c.l.b16 %v302
    %v559 = vunpack.c.l.b16 %v303
    %v560 = vunpack.c.l.b16 %v304
    %v561 = vunpack.c.l.b16 %v305
    %v562 = vunpack.c.l.b16 %v306
    %v563 = vunpack.c.l.b16 %v307
    %v564 = vunpack.c.l.b16 %v308
    %v565 = vunpack.c.l.b16 %v309
    %v566 = vunpack.c.l.b16 %v310
    %v567 = vunpack.c.l.b16 %v311
    %v568 = vunpack.c.l.b16 %v312
    %v569 = vunpack.c.l.b16 %v313
    %v570 = vunpack.c.l.b16 %v314
    %v571 = vunpack.c.l.b16 %v315
    %v572 = vunpack.c.l.b16 %v316
    %v573 = vunpack.c.l.b16 %v317
    %v574 = vunpack.c.l.b16 %v318
    %v575 = vunpack.c.l.b16 %v319
    %v576 = vunpack.c.l.b16 %v320
    %v577 = vunpack.c.l.b16 %v321
    %v578 = vunpack.c.l.b16 %v322
    %v579 = vunpack.c.l.b16 %v323
    %v580 = vunpack.c.l.b16 %v324
    %v581 = vunpack.c.l.b16 %v325
    %v582 = vunpack.c.l.b16 %v326
    %v583 = vunpack.c.l.b16 %v327
    %v584 = vunpack.c.l.b16 %v328
    %v585 = vunpack.c.l.b16 %v329
    %v586 = vunpack.c.l.b16 %v330
    %v587 = vunpack.c.l.b16 %v331
    %v588 = vunpack.c.l.b16 %v332
    %v589 = vunpack.c.l.b16 %v333
    %v590 = vunpack.c.l.b16 %v334
    %v591 = vunpack.c.l.b16 %v335
    %v592 = vunpack.c.l.b16 %v336
    %v593 = vunpack.c.l.b16 %v337
    %v594 = vunpack.c.l.b16 %v338
    %v595 = vunpack.c.l.b16 %v339
    %v596 = vunpack.c.l.b16 %v340
    %v597 = vunpack.c.l.b16 %v341
    %v598 = vunpack.c.l.b16 %v342
    %v599 = vunpack.c.l.b16 %v343
    %v600 = vunpack.c.l.b16 %v344
    %v601 = vunpack.c.l.b16 %v345
    %v602 = vunpack.c.l.b16 %v346
    %v603 = vunpack.c.l.b16 %v347
    %v604 = vunpack.c.l.b16 %v348
    %v605 = vunpack.c.l.b16 %v349
    %v606 = vunpack.c.l.b16 %v350
    %v607 = vunpack.c.l.b16 %v351
    %v608 = vunpack.c.l.b16 %v352
    %v609 = vunpack.c.l.b16 %v353
    %v610 = vunpack.c.l.b16 %v354
    %v611 = vunpack.c.l.b16 %v355
    %v612 = vunpack.c.l.b16 %v356
    %v613 = vunpack.c.l.b16 %v357
    %v614 = vunpack.c.l.b16 %v358
    %v615 = vunpack.c.l.b16 %v359
    %v616 = vunpack.c.l.b16 %v360
    %v617 = vunpack.c.l.b16 %v361
    %v618 = vunpack.c.l.b16 %v362
    %v619 = vunpack.c.l.b16 %v363
    %v620 = vunpack.c.l.b16 %v364
    %v621 = vunpack.c.l.b16 %v365
    %v622 = vunpack.c.l.b16 %v366
    %v623 = vunpack.c.l.b16 %v367
    %v624 = vunpack.c.l.b16 %v368
    %v625 = vunpack.c.l.b16 %v369
    %v626 = vunpack.c.l.b16 %v370
    %v627 = vunpack.c.l.b16 %v371
    %v628 = vunpack.c.l.b16 %v372
    %v629 = vunpack.c.l.b16 %v373
    %v630 = vunpack.c.l.b16 %v374
    %v631 = vunpack.c.l.b16 %v375
    %v632 = vunpack.c.l.b16 %v376
    %v633 = vunpack.c.l.b16 %v377
    %v634 = vunpack.c.l.b16 %v378
    %v635 = vunpack.c.l.b16 %v379
    %v636 = vunpack.c.l.b16 %v380
    %v637 = vunpack.c.l.b16 %v381
    %v638 = vunpack.c.l.b16 %v382
    %v639 = vunpack.c.l.b16 %v383
    %v640 = vunpack.c.l.b16 %v384
    %v641 = vpack.c.b16 %v514, %v513
    %v642 = vpack.c.b16 %v516, %v515
    %v643 = vpack.c.b16 %v518, %v517
    %v644 = vpack.c.b16 %v520, %v519
    %v645 = vpack.c.b16 %v522, %v521
    %v646 = vpack.c.b16 %v524, %v523
    %v647 = vpack.c.b16 %v526, %v525
    %v648 = vpack.c.b16 %v528, %v527
    %v649 = vpack.c.b16 %v530, %v529
    %v650 = vpack.c.b16 %v532, %v531
    %v651 = vpack.c.b16 %v534, %v533
    %v652 = vpack.c.b16 %v536, %v535
    %v653 = vpack.c.b16 %v538, %v537
    %v654 = vpack.c.b16 %v540, %v539
    %v655 = vpack.c.b16 %v542, %v541
    %v656 = vpack.c.b16 %v544, %v543
    %v657 = vpack.c.b16 %v546, %v545
    %v658 = vpack.c.b16 %v548, %v547
    %v659 = vpack.c.b16 %v550, %v549
    %v660 = vpack.c.b16 %v552, %v551
    %v661 = vpack.c.b16 %v554, %v553
    %v662 = vpack.c.b16 %v556, %v555
    %v663 = vpack.c.b16 %v558, %v557
    %v664 = vpack.c.b16 %v560, %v559
    %v665 = vpack.c.b16 %v562, %v561
    %v666 = vpack.c.b16 %v564, %v563
    %v667 = vpack.c.b16 %v566, %v565
    %v668 = vpack.c.b16 %v568, %v567
    %v669 = vpack.c.b16 %v570, %v569
    %v670 = vpack.c.b16 %v572, %v571
    %v671 = vpack.c.b16 %v574, %v573
    %v672 = vpack.c.b16 %v576, %v575
    %v673 = vpack.c.b16 %v578, %v577
    %v674 = vpack.c.b16 %v580, %v579
    %v675 = vpack.c.b16 %v582, %v581
    %v676 = vpack.c.b16 %v584, %v583
    %v677 = vpack.c.b16 %v586, %v585
    %v678 = vpack.c.b16 %v588, %v587
    %v679 = vpack.c.b16 %v590, %v589
    %v680 = vpack.c.b16 %v592, %v591
    %v681 = vpack.c.b16 %v594, %v593
    %v682 = vpack.c.b16 %v596, %v595
    %v683 = vpack.c.b16 %v598, %v597
    %v684 = vpack.c.b16 %v600, %v599
    %v685 = vpack.c.b16 %v602, %v601
    %v686 = vpack.c.b16 %v604, %v603
    %v687 = vpack.c.b16 %v606, %v605
    %v688 = vpack.c.b16 %v608, %v607
    %v689 = vpack.c.b16 %v610, %v609
    %v690 = vpack.c.b16 %v612, %v611
    %v691 = vpack.c.b16 %v614, %v613
    %v692 = vpack.c.b16 %v616, %v615
    %v693 = vpack.c.b16 %v618, %v617
    %v694 = vpack.c.b16 %v620, %v619
    %v695 = vpack.c.b16 %v622, %v621
    %v696 = vpack.c.b16 %v624, %v623
    %v697 = vpack.c.b16 %v626, %v625
    %v698 = vpack.c.b16 %v628, %v627
    %v699 = vpack.c.b16 %v630, %v629
    %v700 = vpack.c.b16 %v632, %v631
    %v701 = vpack.c.b16 %v634, %v633
    %v702 = vpack.c.b16 %v636, %v635
    %v703 = vpack.c.b16 %v638, %v637
    %v704 = vpack.c.b16 %v640, %v639
    %769 = vmatprep.subr.bf16.mxu0 0
    %770 = vmatpush1.bf16.msra.mxu0 %v641
    %771 = vmatprep.subr.bf16.mxu0 0
    %772 = vmatpush1.bf16.msra.mxu0 %v642
    %773 = vmatprep.subr.bf16.mxu0 0
    %774 = vmatpush1.bf16.msra.mxu0 %v643
    %775 = vmatprep.subr.bf16.mxu0 0
    %776 = vmatpush1.bf16.msra.mxu0 %v644
    %777 = vmatprep.subr.bf16.mxu0 0
    %778 = vmatpush1.bf16.msra.mxu0 %v645
    %779 = vmatprep.subr.bf16.mxu0 0
    %780 = vmatpush1.bf16.msra.mxu0 %v646
    %781 = vmatprep.subr.bf16.mxu0 0
    %782 = vmatpush1.bf16.msra.mxu0 %v647
    %783 = vmatprep.subr.bf16.mxu0 0
    %784 = vmatpush1.bf16.msra.mxu0 %v648
    %785 = vmatprep.subr.bf16.mxu0 0
    %786 = vmatpush1.bf16.msra.mxu0 %v649
    %787 = vmatprep.subr.bf16.mxu0 0
    %788 = vmatpush1.bf16.msra.mxu0 %v650
    %789 = vmatprep.subr.bf16.mxu0 0
    %790 = vmatpush1.bf16.msra.mxu0 %v651
    %791 = vmatprep.subr.bf16.mxu0 0
    %792 = vmatpush1.bf16.msra.mxu0 %v652
    %793 = vmatprep.subr.bf16.mxu0 0
    %794 = vmatpush1.bf16.msra.mxu0 %v653
    %795 = vmatprep.subr.bf16.mxu0 0
    %796 = vmatpush1.bf16.msra.mxu0 %v654
    %797 = vmatprep.subr.bf16.mxu0 0
    %798 = vmatpush1.bf16.msra.mxu0 %v655
    %799 = vmatprep.subr.bf16.mxu0 0
    %800 = vmatpush1.bf16.msra.mxu0 %v656
    %801 = vmatprep.mubr.bf16.mxu0 %v250
    %802 = vmatmul.mubr.bf16.gmra.mrb[0].mxu0 %v249
    %v803 = vpop.f32.mrb[0].mxu0
    %v804 = vadd.f32 0.0, %v803
    %v805 = vpop.f32.mrb[0].mxu0
    %v806 = vpop.f32.mrb[0].mxu0
    %v807 = vadd.f32 0.0, %v806
    %v808 = vpop.f32.mrb[0].mxu0
    %809 = vdwg.mxu0
    %810 = vmatprep.subr.bf16.mxu0 0
    %811 = vmatpush1.bf16.msra.mxu0 %v657
    %812 = vmatprep.subr.bf16.mxu0 0
    %813 = vmatpush1.bf16.msra.mxu0 %v658
    %814 = vmatprep.subr.bf16.mxu0 0
    %815 = vmatpush1.bf16.msra.mxu0 %v659
    %816 = vmatprep.subr.bf16.mxu0 0
    %817 = vmatpush1.bf16.msra.mxu0 %v660
    %818 = vmatprep.subr.bf16.mxu0 0
    %819 = vmatpush1.bf16.msra.mxu0 %v661
    %820 = vmatprep.subr.bf16.mxu0 0
    %821 = vmatpush1.bf16.msra.mxu0 %v662
    %822 = vmatprep.subr.bf16.mxu0 0
    %823 = vmatpush1.bf16.msra.mxu0 %v663
    %824 = vmatprep.subr.bf16.mxu0 0
    %825 = vmatpush1.bf16.msra.mxu0 %v664
    %826 = vmatprep.subr.bf16.mxu0 0
    %827 = vmatpush1.bf16.msra.mxu0 %v665
    %828 = vmatprep.subr.bf16.mxu0 0
    %829 = vmatpush1.bf16.msra.mxu0 %v666
    %830 = vmatprep.subr.bf16.mxu0 0
    %831 = vmatpush1.bf16.msra.mxu0 %v667
    %832 = vmatprep.subr.bf16.mxu0 0
    %833 = vmatpush1.bf16.msra.mxu0 %v668
    %834 = vmatprep.subr.bf16.mxu0 0
    %835 = vmatpush1.bf16.msra.mxu0 %v669
    %836 = vmatprep.subr.bf16.mxu0 0
    %837 = vmatpush1.bf16.msra.mxu0 %v670
    %838 = vmatprep.subr.bf16.mxu0 0
    %839 = vmatpush1.bf16.msra.mxu0 %v671
    %840 = vmatprep.subr.bf16.mxu0 0
    %841 = vmatpush1.bf16.msra.mxu0 %v672
    %842 = vmatprep.mubr.bf16.mxu0 %v252
    %843 = vmatmul.mubr.bf16.gmra.mrb[0].mxu0 %v251
    %v844 = vpop.f32.mrb[0].mxu0
    %v845 = vadd.f32 %v804, %v844
    %v846 = vpop.f32.mrb[0].mxu0
    %v847 = vpop.f32.mrb[0].mxu0
    %v848 = vadd.f32 %v807, %v847
    %v849 = vpop.f32.mrb[0].mxu0
    %850 = vdwg.mxu0
    %851 = vmatprep.subr.bf16.mxu0 0
    %852 = vmatpush1.bf16.msra.mxu0 %v673
    %853 = vmatprep.subr.bf16.mxu0 0
    %854 = vmatpush1.bf16.msra.mxu0 %v674
    %855 = vmatprep.subr.bf16.mxu0 0
    %856 = vmatpush1.bf16.msra.mxu0 %v675
    %857 = vmatprep.subr.bf16.mxu0 0
    %858 = vmatpush1.bf16.msra.mxu0 %v676
    %859 = vmatprep.subr.bf16.mxu0 0
    %860 = vmatpush1.bf16.msra.mxu0 %v677
    %861 = vmatprep.subr.bf16.mxu0 0
    %862 = vmatpush1.bf16.msra.mxu0 %v678
    %863 = vmatprep.subr.bf16.mxu0 0
    %864 = vmatpush1.bf16.msra.mxu0 %v679
    %865 = vmatprep.subr.bf16.mxu0 0
    %866 = vmatpush1.bf16.msra.mxu0 %v680
    %867 = vmatprep.subr.bf16.mxu0 0
    %868 = vmatpush1.bf16.msra.mxu0 %v681
    %869 = vmatprep.subr.bf16.mxu0 0
    %870 = vmatpush1.bf16.msra.mxu0 %v682
    %871 = vmatprep.subr.bf16.mxu0 0
    %872 = vmatpush1.bf16.msra.mxu0 %v683
    %873 = vmatprep.subr.bf16.mxu0 0
    %874 = vmatpush1.bf16.msra.mxu0 %v684
    %875 = vmatprep.subr.bf16.mxu0 0
    %876 = vmatpush1.bf16.msra.mxu0 %v685
    %877 = vmatprep.subr.bf16.mxu0 0
    %878 = vmatpush1.bf16.msra.mxu0 %v686
    %879 = vmatprep.subr.bf16.mxu0 0
    %880 = vmatpush1.bf16.msra.mxu0 %v687
    %881 = vmatprep.subr.bf16.mxu0 0
    %882 = vmatpush1.bf16.msra.mxu0 %v688
    %883 = vmatprep.mubr.bf16.mxu0 %v254
    %884 = vmatmul.mubr.bf16.gmra.mrb[0].mxu0 %v253
    %v885 = vpop.f32.mrb[0].mxu0
    %v886 = vadd.f32 %v845, %v885
    %v887 = vpop.f32.mrb[0].mxu0
    %v888 = vpop.f32.mrb[0].mxu0
    %v889 = vadd.f32 %v848, %v888
    %v890 = vpop.f32.mrb[0].mxu0
    %891 = vdwg.mxu0
    %892 = vmatprep.subr.bf16.mxu0 0
    %893 = vmatpush1.bf16.msra.mxu0 %v689
    %894 = vmatprep.subr.bf16.mxu0 0
    %895 = vmatpush1.bf16.msra.mxu0 %v690
    %896 = vmatprep.subr.bf16.mxu0 0
    %897 = vmatpush1.bf16.msra.mxu0 %v691
    %898 = vmatprep.subr.bf16.mxu0 0
    %899 = vmatpush1.bf16.msra.mxu0 %v692
    %900 = vmatprep.subr.bf16.mxu0 0
    %901 = vmatpush1.bf16.msra.mxu0 %v693
    %902 = vmatprep.subr.bf16.mxu0 0
    %903 = vmatpush1.bf16.msra.mxu0 %v694
    %904 = vmatprep.subr.bf16.mxu0 0
    %905 = vmatpush1.bf16.msra.mxu0 %v695
    %906 = vmatprep.subr.bf16.mxu0 0
    %907 = vmatpush1.bf16.msra.mxu0 %v696
    %908 = vmatprep.subr.bf16.mxu0 0
    %909 = vmatpush1.bf16.msra.mxu0 %v697
    %910 = vmatprep.subr.bf16.mxu0 0
    %911 = vmatpush1.bf16.msra.mxu0 %v698
    %912 = vmatprep.subr.bf16.mxu0 0
    %913 = vmatpush1.bf16.msra.mxu0 %v699
    %914 = vmatprep.subr.bf16.mxu0 0
    %915 = vmatpush1.bf16.msra.mxu0 %v700
    %916 = vmatprep.subr.bf16.mxu0 0
    %917 = vmatpush1.bf16.msra.mxu0 %v701
    %918 = vmatprep.subr.bf16.mxu0 0
    %919 = vmatpush1.bf16.msra.mxu0 %v702
    %920 = vmatprep.subr.bf16.mxu0 0
    %921 = vmatpush1.bf16.msra.mxu0 %v703
    %922 = vmatprep.subr.bf16.mxu0 0
    %923 = vmatpush1.bf16.msra.mxu0 %v704
    %924 = vmatprep.mubr.bf16.mxu0 %v256
    %925 = vmatmul.mubr.bf16.gmra.mrb[0].mxu0 %v255
    %v926 = vpop.f32.mrb[0].mxu0
    %v927 = vadd.f32 %v886, %v926
    %v928 = vpop.f32.mrb[0].mxu0
    %v929 = vpop.f32.mrb[0].mxu0
    %v930 = vadd.f32 %v889, %v929
    %v931 = vpop.f32.mrb[0].mxu0
    %932 = vdwg.mxu0
    %v933 = vmul.f32 %v927, %v927
    %v934 = vmul.f32 %v930, %v930
    %935 = vadd.xlane.f32.xlu0 %v933
    %v936 = vpop.xlane.xlu0 %935
    %937 = vadd.xlane.f32.xlu0 %v934
    %v938 = vpop.xlane.xlu0 %937
    %v939 = vmax.f32 %v936, 1e-24
    %v940 = vmax.f32 %v938, 1e-24
    %v941 = vrsqrt.pop %v939
    %v942 = vrsqrt.pop %v940
    %v943 = vmul.f32 %v927, %v941
    %v944 = vmul.f32 %v930, %v942
    %v945 = vpack.c.bf16 %v944, %v943
    %v946 = vld [vmem:[#allocation7] sm:$0xf]
    %v947 = vld [vmem:[#allocation7 + $0x4] sm:$0xf]
    %v948 = vld [vmem:[#allocation7 + $0x8] sm:$0xf]
    %v949 = vld [vmem:[#allocation7 + $0xc] sm:$0xf]
    %v950 = vld [vmem:[#allocation7 + $0x10] sm:$0xf]
    %v951 = vld [vmem:[#allocation7 + $0x14] sm:$0xf]
    %v952 = vld [vmem:[#allocation7 + $0x18] sm:$0xf]
    %v953 = vld [vmem:[#allocation7 + $0x1c] sm:$0xf]
    %v954 = vld [vmem:[#allocation7 + $0x20] sm:$0xf]
    %v955 = vld [vmem:[#allocation7 + $0x24] sm:$0xf]
    %v956 = vld [vmem:[#allocation7 + $0x28] sm:$0xf]
    %v957 = vld [vmem:[#allocation7 + $0x2c] sm:$0xf]
    %v958 = vld [vmem:[#allocation7 + $0x30] sm:$0xf]
    %v959 = vld [vmem:[#allocation7 + $0x34] sm:$0xf]
    %v960 = vld [vmem:[#allocation7 + $0x38] sm:$0xf]
    %v961 = vld [vmem:[#allocation7 + $0x3c] sm:$0xf]
    %v978 = vunpack.c.l.b16 %v946
    %v979 = vunpack.c.l.b16 %v947
    %v980 = vunpack.c.l.b16 %v948
    %v981 = vunpack.c.l.b16 %v949
    %v982 = vunpack.c.l.b16 %v950
    %v983 = vunpack.c.l.b16 %v951
    %v984 = vunpack.c.l.b16 %v952
    %v985 = vunpack.c.l.b16 %v953
    %v986 = vunpack.c.l.b16 %v954
    %v987 = vunpack.c.l.b16 %v955
    %v988 = vunpack.c.l.b16 %v956
    %v989 = vunpack.c.l.b16 %v957
    %v990 = vunpack.c.l.b16 %v958
    %v991 = vunpack.c.l.b16 %v959
    %v992 = vunpack.c.l.b16 %v960
    %v993 = vunpack.c.l.b16 %v961
    %v994 = vpack.c.b16 %v979, %v978
    %v995 = vpack.c.b16 %v981, %v980
    %v996 = vpack.c.b16 %v983, %v982
    %v997 = vpack.c.b16 %v985, %v984
    %v998 = vpack.c.b16 %v987, %v986
    %v999 = vpack.c.b16 %v989, %v988
    %v1000 = vpack.c.b16 %v991, %v990
    %v1001 = vpack.c.b16 %v993, %v992
    %1010 = vmatprep.subr.bf16.mxu0 0
    %1011 = vmatpush1.bf16.msra.mxu0 %v994
    %1012 = vmatprep.subr.bf16.mxu0 0
    %1013 = vmatpush1.bf16.msra.mxu0 %v995
    %1014 = vmatprep.subr.bf16.mxu0 0
    %1015 = vmatpush1.bf16.msra.mxu0 %v996
    %1016 = vmatprep.subr.bf16.mxu0 0
    %1017 = vmatpush1.bf16.msra.mxu0 %v997
    %1018 = vmatprep.subr.bf16.mxu0 0
    %1019 = vmatpush1.bf16.msra.mxu0 %v998
    %1020 = vmatprep.subr.bf16.mxu0 0
    %1021 = vmatpush1.bf16.msra.mxu0 %v999
    %1022 = vmatprep.subr.bf16.mxu0 0
    %1023 = vmatpush1.bf16.msra.mxu0 %v1000
    %1024 = vmatprep.subr.bf16.mxu0 0
    %1025 = vmatpush1.bf16.msra.mxu0 %v1001
    %1026 = vmatprep.subr.bf16.mxu0 0
    %1027 = vmatpush1.bf16.msra.mxu0 0
    %1028 = vmatprep.subr.bf16.mxu0 0
    %1029 = vmatpush1.bf16.msra.mxu0 0
    %1030 = vmatprep.subr.bf16.mxu0 0
    %1031 = vmatpush1.bf16.msra.mxu0 0
    %1032 = vmatprep.subr.bf16.mxu0 0
    %1033 = vmatpush1.bf16.msra.mxu0 0
    %1034 = vmatprep.subr.bf16.mxu0 0
    %1035 = vmatpush1.bf16.msra.mxu0 0
    %1036 = vmatprep.subr.bf16.mxu0 0
    %1037 = vmatpush1.bf16.msra.mxu0 0
    %1038 = vmatprep.subr.bf16.mxu0 0
    %1039 = vmatpush1.bf16.msra.mxu0 0
    %1040 = vmatprep.subr.bf16.mxu0 0
    %1041 = vmatpush1.bf16.msra.mxu0 0
    %1042 = vmatprep.mubr.bf16.mxu0 0
    %1043 = vmatmul.mubr.bf16.gmra.mrb[0].mxu0 %v945
    %v1044 = vpop.f32.mrb[0].mxu0
    %v1045 = vadd.f32 0.0, %v1044
    %v1046 = vpop.f32.mrb[0].mxu0
    %v1047 = vpop.f32.mrb[0].mxu0
    %v1048 = vadd.f32 0.0, %v1047
    %v1049 = vpop.f32.mrb[0].mxu0
    %1050 = vdwg.mxu0
    %1051 = vst [vmem:[#allocation8] sm:$0xff] %v1045
    %1052 = vst [vmem:[#allocation8 + $0x8] sm:$0xff] %v1048
    // Predicated region
    $region26: #{tpu_custom_call.1} parent=1 // pred_check
      _
    $region27: #{tpu_custom_call.1} parent=1 // pred_check_branch
      %1054 = sbr.rel (0) target = $region29
    $region28: #{tpu_custom_call.1} parent=1 // pred_region
      %s1056 = ssub.s32 256, 256
      %1057 = vsyncadd [#allocation4], %s1056
      %s1058 = sshll.u32 [#allocation8], 4
      %s1059 = int_to_ptr.vmem [resolvable:$true] %s1058
      %1064 = dma.vmem_to_hbm [thread:$0]  %s1059, 256, %s3, [#allocation4], 128, 128, 8
    $region29: #{tpu_custom_call.1} parent=1 // pred_fallthru
      _
    // Predicated region
    $region30: #{tpu_custom_call.1} parent=1 // pred_check
      _
    $region31: #{tpu_custom_call.1} parent=1 // pred_check_branch
      %1066 = sbr.rel (0) target = $region33
    $region32: #{tpu_custom_call.1} parent=1 // pred_region
      %1067 = dma.done [#allocation4], 256
    $region33: #{tpu_custom_call.1} parent=1 // pred_fallthru
      _
    %1068 = vsyncpa [#allocation3], 1
    %1069 = vsyncpa [#allocation6], 1
    %1070 = vsyncpa [#allocation4], 1

</llo_original>
